<compile_context>
chip_gen: v5e
topology: v5e:2x2
jax: 0.10.0
libtpu: 0.0.40
codegen_flags: <defaults>
</compile_context>

<pallas_src>
import functools

import jax
import jax.numpy as jnp
from jax.experimental import pallas as pl
from jax.experimental.pallas import tpu as pltpu


def _cdiv(a: int, b: int) -> int:
    return (a + b - 1) // b


def _round_up(a: int, b: int) -> int:
    return _cdiv(a, b) * b


# --------------------------------------------------------------------------
# Generation-aware VMEM parameters
# --------------------------------------------------------------------------
@functools.lru_cache(maxsize=None)
def _vmem_params():
    """Returns (tile_budget_bytes, vmem_limit_bytes, num_tensorcores).

    v5e/v6e: 128 MiB physical VMEM, 1 TensorCore  -> big tiles, 64 MiB limit.
    v7x    :  64 MiB physical VMEM, 2 TensorCores -> tighter budget, 32 MiB.
    Falls back to conservative (v7x-safe) values if the query fails.
    """
    vmem_bytes = 64 * 1024 * 1024
    try:
        info = pltpu.get_tpu_info()
        for attr in ("vmem_capacity_bytes", "vmem_size_bytes", "vmem_bytes"):
            v = getattr(info, attr, None)
            if isinstance(v, int) and v > 0:
                vmem_bytes = v
                break
    except Exception:
        pass
    if vmem_bytes >= 96 * 1024 * 1024:
        # 128 MiB-VMEM parts (v5e/v6e), single TensorCore.
        return 20 * 1024 * 1024, 64 * 1024 * 1024, 1
    # 64 MiB-VMEM parts (v7x), 2 TensorCores per chip.
    return 12 * 1024 * 1024, 32 * 1024 * 1024, 2


# --------------------------------------------------------------------------
# Kernels
# --------------------------------------------------------------------------
def _softmax_lane_kernel(x_ref, o_ref):
    """Stable softmax over the last (lane) axis of a (TM, N) tile."""
    x = x_ref[...].astype(jnp.float32)
    m = jnp.max(x, axis=-1, keepdims=True)
    e = jnp.exp(x - m)                      # single exp per element (EUP)
    denom = jnp.sum(e, axis=-1, keepdims=True)
    inv = 1.0 / denom                       # exact, one reciprocal per row
    o_ref[...] = (e * inv).astype(o_ref.dtype)


def _softmax_sublane_kernel(x_ref, o_ref):
    """Stable softmax over the sublane axis of a 2-D (R, TC) tile.

    Reduction goes through the XLU; trailing axis stays lane-dense so stores
    are unmasked vst's and no transpose is needed in the wrapper.
    """
    x = x_ref[...].astype(jnp.float32)
    m = jnp.max(x, axis=0, keepdims=True)
    e = jnp.exp(x - m)
    denom = jnp.sum(e, axis=0, keepdims=True)
    inv = 1.0 / denom                       # exact, one reciprocal per column
    o_ref[...] = (e * inv).astype(o_ref.dtype)


# --------------------------------------------------------------------------
# pallas_call wrappers
# --------------------------------------------------------------------------
def _softmax_lastdim_2d(x2d, tile_rows, vmem_limit):
    M, N = x2d.shape
    itemsize = jnp.dtype(x2d.dtype).itemsize
    cost = pl.CostEstimate(
        flops=5 * M * N,
        transcendentals=M * N,
        bytes_accessed=2 * M * N * itemsize,
    )
    return pl.pallas_call(
        _softmax_lane_kernel,
        out_shape=jax.ShapeDtypeStruct((M, N), x2d.dtype),
        grid_spec=pltpu.PrefetchScalarGridSpec(
            num_scalar_prefetch=0,
            grid=(_cdiv(M, tile_rows),),
            in_specs=[pl.BlockSpec((tile_rows, N), lambda i: (i, 0))],
            out_specs=pl.BlockSpec((tile_rows, N), lambda i: (i, 0)),
        ),
        compiler_params=pltpu.CompilerParams(
            dimension_semantics=("parallel",),
            vmem_limit_bytes=vmem_limit,
        ),
        cost_estimate=cost,
    )(x2d)


def _softmax_sublane_3d(x3d, tile_c, vmem_limit):
    B, R, C = x3d.shape
    itemsize = jnp.dtype(x3d.dtype).itemsize
    cost = pl.CostEstimate(
        flops=5 * B * R * C,
        transcendentals=B * R * C,
        bytes_accessed=2 * B * R * C * itemsize,
    )
    blk = (pl.Squeezed(), R, tile_c)        # kernel sees a 2-D (R, TC) ref
    return pl.pallas_call(
        _softmax_sublane_kernel,
        out_shape=jax.ShapeDtypeStruct((B, R, C), x3d.dtype),
        grid_spec=pltpu.PrefetchScalarGridSpec(
            num_scalar_prefetch=0,
            grid=(B, _cdiv(C, tile_c)),
            in_specs=[pl.BlockSpec(blk, lambda b, c: (b, 0, c))],
            out_specs=pl.BlockSpec(blk, lambda b, c: (b, 0, c)),
        ),
        compiler_params=pltpu.CompilerParams(
            dimension_semantics=("parallel", "parallel"),
            vmem_limit_bytes=vmem_limit,
        ),
        cost_estimate=cost,
    )(x3d)


# --------------------------------------------------------------------------
# Tile selection (VMEM-budgeted, temp-aware, multiple-of-(8,128) or full extent)
# --------------------------------------------------------------------------
def _pick_tile_rows(M, N, itemsize, budget, num_cores):
    if M <= 8:
        return M  # full extent: always a legal block, single step
    # Double-buffered in+out (4x) plus f32 temporaries x/e/result (~3x f32).
    per_row = 4 * N * itemsize + 3 * N * 4
    t = max(8, (budget // max(per_row, 1)) // 8 * 8)
    target_steps = 1
    if num_cores > 1:
        target_steps = 2 * num_cores        # megacore load balancing
    if M >= 8 * 512:
        target_steps = max(target_steps, 8)  # hide pipeline prologue/epilogue
    if target_steps > 1:
        t_steps = max(512 if M >= 512 * target_steps else 8,
                      _round_up(_cdiv(M, target_steps), 8))
        t = min(t, t_steps)
    if t >= M:
        return M
    return max(8, t)
    # TODO(synk): rows whose full N blows the VMEM budget at 8 rows would need
    # a column-tiled two-pass / online softmax; not implemented here.


def _pick_tile_c(B, R, C, itemsize, budget, num_cores):
    if C <= 128:
        return C  # full extent
    per_col = 4 * R * itemsize + 3 * R * 4
    t = max(128, (budget // max(per_col, 1)) // 128 * 128)
    target_steps = 1
    if num_cores > 1:
        target_steps = 2 * num_cores
    if B * C >= 8 * 512:
        target_steps = max(target_steps, 8)
    if B < target_steps:                    # B already provides grid steps
        c_steps = _cdiv(target_steps, B)
        t_steps = max(512 if C >= 512 * c_steps else 128,
                      _round_up(_cdiv(C, c_steps), 128))
        t = min(t, t_steps)
    if t >= C:
        return C
    return max(128, t)


# --------------------------------------------------------------------------
# Public wrapper: equivalent of torch.nn.LogSoftmax(dim)(x).exp()
# --------------------------------------------------------------------------
@functools.partial(jax.jit, static_argnames=("dim",))
def stable_softmax(x, dim: int = 0):
    ndim = x.ndim
    axis = dim % ndim
    itemsize = jnp.dtype(x.dtype).itemsize
    budget, vmem_limit, num_cores = _vmem_params()

    if axis == ndim - 1:
        # Softmax over the last axis: lane-reduce kernel, free reshape only.
        lead = 1
        for s in x.shape[:-1]:
            lead *= s
        N = x.shape[-1]
        x2d = x.reshape(lead, N)
        tr = _pick_tile_rows(lead, N, itemsize, budget, num_cores)
        return _softmax_lastdim_2d(x2d, tr, vmem_limit).reshape(x.shape)

    # Softmax over a non-last axis: keep trailing axes lane-dense and reduce
    # along the sublane axis (no moveaxis => no extra HBM passes).
    B = 1
    for s in x.shape[:axis]:
        B *= s
    R = x.shape[axis]
    C = 1
    for s in x.shape[axis + 1:]:
        C *= s

    # One (R, tile_c) block (double-buffered in+out plus f32 temps) must fit.
    per_col = 4 * R * itemsize + 3 * R * 4
    if C > 1 and per_col * min(C, 128) <= budget:
        x3d = x.reshape(B, R, C)
        tc = _pick_tile_c(B, R, C, itemsize, budget, num_cores)
        return _softmax_sublane_3d(x3d, tc, vmem_limit).reshape(x.shape)

    # Fallback (degenerate trailing size, or reduce dim too large to hold as a
    # full block): transpose the reduce axis last and lane-reduce.
    # TODO(synk): an R-chunked sublane kernel with running max/sum would avoid
    # the two extra HBM passes this moveaxis costs.
    x_moved = jnp.moveaxis(x, axis, -1)
    mshape = x_moved.shape
    lead = 1
    for s in mshape[:-1]:
        lead *= s
    N = mshape[-1]
    x2d = x_moved.reshape(lead, N)
    tr = _pick_tile_rows(lead, N, itemsize, budget, num_cores)
    out2d = _softmax_lastdim_2d(x2d, tr, vmem_limit)
    return jnp.moveaxis(out2d.reshape(mshape), -1, axis)


if __name__ == "__main__":
    key = jax.random.PRNGKey(0)
    k1, k2 = jax.random.split(key)

    # Module default: dim=0 softmax on a (seq=8, hidden=32) activation.
    x = jax.random.normal(k1, (8, 32), dtype=jnp.float32)
    out = jax.block_until_ready(stable_softmax(x, dim=0))
    ref = jnp.exp(jax.nn.log_softmax(x, axis=0))
    assert out.shape == x.shape and out.dtype == x.dtype
    assert jnp.allclose(out, ref, atol=1e-6, rtol=1e-5)
    assert jnp.allclose(jnp.sum(out, axis=0), 1.0, atol=1e-5)

    # Last-dim softmax (lane-reduce path) on (batch=2, seq=8, hidden=32).
    y = jax.random.normal(k2, (2, 8, 32), dtype=jnp.float32)
    out_y = jax.block_until_ready(stable_softmax(y, dim=-1))
    ref_y = jnp.exp(jax.nn.log_softmax(y, axis=-1))
    assert jnp.allclose(out_y, ref_y, atol=1e-6, rtol=1e-5)

    # Middle-dim softmax (sublane path with a real batch grid axis).
    out_m = jax.block_until_ready(stable_softmax(y, dim=1))
    ref_m = jnp.exp(jax.nn.log_softmax(y, axis=1))
    assert jnp.allclose(out_m, ref_m, atol=1e-6, rtol=1e-5)

    print("KERNEL_OK")
</pallas_src>

<mosaic_0001>
module attributes {stable_mosaic.version = 11 : i64} {
  func.func @_softmax_sublane_kernel(%arg0: i32, %arg1: i32, %arg2: memref<1x8x32xf32, #tpu.memory_space<vmem>>, %arg3: memref<1x8x32xf32, #tpu.memory_space<vmem>>) attributes {dimension_semantics = [#tpu.dimension_semantics<parallel>, #tpu.dimension_semantics<parallel>], iteration_bounds = array<i64: 1, 1>, scalar_prefetch = 0 : i64, scratch_operands = 0 : i64, tpu.core_type = #tpu.core_type<tc>, window_params = [{transform_indices = @transform_0, window_bounds = array<i64: 1, 8, 32>}, {transform_indices = @transform_1, window_bounds = array<i64: 1, 8, 32>}]} {
    %c0 = arith.constant 0 : index
    %c0_0 = arith.constant 0 : index
    %c0_1 = arith.constant 0 : index
    %0 = vector.load %arg2[%c0, %c0_0, %c0_1] : memref<1x8x32xf32, #tpu.memory_space<vmem>>, vector<1x8x32xf32>
    %1 = vector.shape_cast %0 : vector<1x8x32xf32> to vector<8x32xf32>
    %cst = arith.constant dense<0xFF800000> : vector<32xf32>
    %2 = vector.multi_reduction <maximumf>, %1, %cst [0] : vector<8x32xf32> to vector<32xf32>
    %3 = vector.shape_cast %2 : vector<32xf32> to vector<1x32xf32>
    %4 = vector.broadcast %3 : vector<1x32xf32> to vector<8x32xf32>
    %5 = arith.subf %1, %4 : vector<8x32xf32>
    %6 = math.exp %5 : vector<8x32xf32>
    %cst_2 = arith.constant dense<0.000000e+00> : vector<32xf32>
    %7 = vector.multi_reduction <add>, %6, %cst_2 [0] : vector<8x32xf32> to vector<32xf32>
    %8 = vector.shape_cast %7 : vector<32xf32> to vector<1x32xf32>
    %cst_3 = arith.constant 1.000000e+00 : f32
    %9 = vector.broadcast %cst_3 : f32 to vector<1x32xf32>
    %10 = arith.divf %9, %8 : vector<1x32xf32>
    %11 = vector.broadcast %10 : vector<1x32xf32> to vector<8x32xf32>
    %12 = arith.mulf %6, %11 : vector<8x32xf32>
    %c0_4 = arith.constant 0 : index
    %c0_5 = arith.constant 0 : index
    %c0_6 = arith.constant 0 : index
    %13 = vector.load %arg3[%c0_4, %c0_5, %c0_6] : memref<1x8x32xf32, #tpu.memory_space<vmem>>, vector<1x8x32xf32>
    %14 = vector.shape_cast %13 : vector<1x8x32xf32> to vector<8x32xf32>
    %15 = vector.shape_cast %12 : vector<8x32xf32> to vector<1x8x32xf32>
    tpu.vector_store %arg3[%c0_4, %c0_5, %c0_6], %15 {strides = array<i32>} : memref<1x8x32xf32, #tpu.memory_space<vmem>>, vector<1x8x32xf32>,
    return
  }
  func.func @transform_0(%arg0: i32, %arg1: i32) -> (i32, i32, i32) {
    %c0_i32 = arith.constant 0 : i32
    %c0_i32_0 = arith.constant 0 : i32
    return %arg0, %c0_i32, %arg1 : i32, i32, i32
  }
  func.func @transform_1(%arg0: i32, %arg1: i32) -> (i32, i32, i32) {
    %c0_i32 = arith.constant 0 : i32
    %c0_i32_0 = arith.constant 0 : i32
    return %arg0, %c0_i32, %arg1 : i32, i32, i32
  }
}

</mosaic_0001>

<llo_original>
// kernel: stable_softmax.1
$region0: #{stable_softmax.1}
  #allocation0 [shape = 'u32[]', space=smem, size = 0x4, offset = 0x4, fixed_abs, tag = 'smem constant byte address 0x4 - core index']
  #allocation1 [shape = 'u32[72,128]{1,0:T(1,128)}', space=vmem, size = 0x9000, scoped, tag = 'internal scratch']
  %s0 = inlined_call_operand.hbm [shape: f32[1,8,32], index: 0, kind: input, shape index: {}]
  %s1 = inlined_call_operand.hbm [shape: f32[1,8,32], index: 1, kind: output, shape index: {}]
  %s2 = sld [smem:[#allocation0]]
  $region18: #{stable_softmax.1} parent=0
    _
  %s4 = ssub.s32 1, %s2
  %s5 = scalar_select 0, %s4, %s2
  $region1: #{stable_softmax.1} parent=0
    #allocation2 [shape = 'u8[4096]{0}', space=vmem, size = 0x1000, scoped, tag = 'input window, operand 0, single buffered']
    #allocation3 [shape = 's32[1]{0}', space=sflag, size = 0x4, scoped, tag = 'scoped memory for stable_softmax.1']
    #allocation4 [shape = 's32[1]{0}', space=sflag, size = 0x4, scoped, tag = 'scoped memory for stable_softmax.1']
    #allocation5 [shape = 'u8[4096]{0}', space=vmem, size = 0x1000, scoped, tag = 'output window, operand 0, single buffered']
    %6 = vsyncpa [#allocation3], 0
    %7 = vsyncpa [#allocation4], 0
    // Predicated region
    $region2: #{stable_softmax.1} parent=1 // pred_check
      _
    $region3: #{stable_softmax.1} parent=1 // pred_check_branch
      %9 = sbr.rel (0) target = $region5
    $region4: #{stable_softmax.1} parent=1 // pred_region
      %11 = vsyncadd [#allocation3], 0
      %s13 = sshll.u32 %s0, 4
      %s14 = int_to_ptr.hbm [resolvable:$true] %s13
      %s15 = sshll.u32 [#allocation2], 4
      %s16 = int_to_ptr.vmem [resolvable:$true] %s15
      %18 = dma.hbm_to_vmem [thread:$0]  %s14, 128, %s16, [#allocation3]
    $region5: #{stable_softmax.1} parent=1 // pred_fallthru
      _
    // Predicated region
    $region6: #{stable_softmax.1} parent=1 // pred_check
      _
    $region7: #{stable_softmax.1} parent=1 // pred_check_branch
      %20 = sbr.rel (0) target = $region9
    $region8: #{stable_softmax.1} parent=1 // pred_region
      %22 = dma.done [#allocation3], 128
    $region9: #{stable_softmax.1} parent=1 // pred_fallthru
      _
    %v23 = vld [vmem:[#allocation2] sm:$0xff]
    %vm24 = vcmask 261120
    %v25 = vsel %vm24, %v23, -inf
    %v26 = vrot.slane %v25, 4
    %v27 = vmax.f32 %v25, %v26
    %v28 = vrot.slane %v27, 2
    %v29 = vmax.f32 %v27, %v28
    %v30 = vrot.slane %v29, 1
    %v31 = vmax.f32 %v29, %v30
    %v32 = vsub.f32 %v23, %v31
    %v33 = vmul.f32 %v32, 1.442695
    %v34 = vpow.pop %v33
    %v35 = vsel %vm24, %v34, 0.0
    %v36 = vrot.slane %v35, 4
    %v37 = vadd.f32 %v35, %v36
    %v38 = vrot.slane %v37, 2
    %v39 = vadd.f32 %v37, %v38
    %v40 = vrot.slane %v39, 1
    %v41 = vadd.f32 %v39, %v40
    %v42 = vrcp.pop %v41
    %v43 = vmul.f32 %v41, %v42
    %v44 = vsub.f32 1.0, %v43
    %v45 = vmul.f32 %v42, %v44
    %v46 = vadd.f32 %v42, %v45
    %vm47 = vweird.f32 %v41
    %vm48 = vweird.f32 %v42
    %vm49 = vmor %vm47, %vm48
    %v50 = vsel %vm49, %v42, %v46
    %v51 = vand.u32 2147483647, %v41
    %vm52 = vcmp.eq.f32.partialorder %v51, 8.507059e+37
    %v53 = vand.u32 %v41, 2147483648
    %v54 = vor.u32 1.1754944e-38, %v53
    %v55 = vsel %vm52, %v54, %v50
    %v56 = vmul.f32 1.0, %v55
    %v57 = vmul.f32 %v34, %v56
    %58 = vst.msk [vmem:[#allocation5] sm:$0xff] %vm24, %v57
    // Predicated region
    $region10: #{stable_softmax.1} parent=1 // pred_check
      _
    $region11: #{stable_softmax.1} parent=1 // pred_check_branch
      %60 = sbr.rel (0) target = $region13
    $region12: #{stable_softmax.1} parent=1 // pred_region
      %62 = vsyncadd [#allocation4], 0
      %s64 = sshll.u32 [#allocation5], 4
      %s65 = int_to_ptr.vmem [resolvable:$true] %s64
      %s66 = sshll.u32 %s1, 4
      %s67 = int_to_ptr.hbm [resolvable:$true] %s66
      %69 = dma.vmem_to_hbm [thread:$0]  %s65, 128, %s67, [#allocation4]
    $region13: #{stable_softmax.1} parent=1 // pred_fallthru
      _
    // Predicated region
    $region14: #{stable_softmax.1} parent=1 // pred_check
      _
    $region15: #{stable_softmax.1} parent=1 // pred_check_branch
      %71 = sbr.rel (0) target = $region17
    $region16: #{stable_softmax.1} parent=1 // pred_region
      %73 = dma.done [#allocation4], 128
    $region17: #{stable_softmax.1} parent=1 // pred_fallthru
      _
    %74 = vsyncpa [#allocation3], 1
    %75 = vsyncpa [#allocation4], 1

</llo_original>
